<compile_context>
chip_gen: v7x
topology: tpu7x:2x2x1
jax: 0.10.0
libtpu: 0.0.40
codegen_flags: <defaults>
</compile_context>

<pallas_src>
from functools import partial

import jax
import jax.numpy as jnp
from jax.experimental import pallas as pl
from jax.experimental.pallas import tpu as pltpu


# ----------------------------------------------------------------------------
# Pallas kernel: per-sample focal loss for one (TILE_N, C) tile of logits.
# ----------------------------------------------------------------------------
def _focal_loss_kernel(logits_ref, tgt_ref, loss_ref, *, alpha, gamma):
    x = logits_ref[...].astype(jnp.float32)                 # (TN, C)
    t = tgt_ref[...]                                        # (TN, 1) int32

    # Numerically-stable softmax pieces (single exp pass over the tile).
    m = jnp.max(x, axis=-1, keepdims=True)                  # (TN, 1)
    z = x - m                                               # (TN, C)
    ez = jnp.exp(z)                                         # (TN, C)  EUP
    se = jnp.sum(ez, axis=-1, keepdims=True)                # (TN, 1)

    # Gather the target column via an iota == target mask (no dynamic DMA).
    col = jax.lax.broadcasted_iota(jnp.int32, x.shape, 1)   # (TN, C)
    onehot = col == t                                       # (TN, C)
    z_t = jnp.sum(jnp.where(onehot, z, 0.0), axis=-1, keepdims=True)   # (TN, 1)
    e_t = jnp.sum(jnp.where(onehot, ez, 0.0), axis=-1, keepdims=True)  # (TN, 1)

    ce = jnp.log(se) - z_t                                  # (TN, 1), >= 0
    pt = e_t / se                                           # == exp(-ce), reuses exp
    one_m_pt = 1.0 - pt
    if gamma == 2.0:                                        # default: VALU only
        mod = one_m_pt * one_m_pt
    elif gamma == 1.0:
        mod = one_m_pt
    elif gamma == 0.0:
        mod = jnp.ones_like(one_m_pt)
    else:
        mod = jnp.power(one_m_pt, gamma)
    loss_ref[...] = (alpha * mod * ce).astype(loss_ref.dtype)


# ----------------------------------------------------------------------------
# Tile-size heuristic: big blocks (amortize per-step overhead), balanced
# across the grid so batch padding stays small, multiple of 8 sublanes.
# ----------------------------------------------------------------------------
def _pick_tile_n(n, c, itemsize, *, target_bytes=1 << 20, max_rows=1024):
    cap = max(8, min(max_rows, target_bytes // max(1, c * itemsize)))
    cap = (cap // 8) * 8
    num_tiles = -(-n // cap)                  # cdiv
    rows = -(-n // num_tiles)                 # balance rows per tile
    rows = -(-rows // 8) * 8                  # round up to sublane multiple
    return max(8, rows)


# ----------------------------------------------------------------------------
# Wrapper: row-tiled pallas_call producing the per-sample focal loss.
# ----------------------------------------------------------------------------
def focal_loss_per_sample(logits, targets, *, alpha=0.25, gamma=2.0, tile_n=None):
    N, C = logits.shape
    targets = targets.astype(jnp.int32).reshape(N, 1)

    if tile_n is None:
        tile_n = _pick_tile_n(N, C, jnp.dtype(logits.dtype).itemsize)

    # Pad the batch axis so every grid block is full/in-bounds (padding is
    # < 8 * num_tiles rows thanks to the balanced tile choice above).
    n_pad = pl.cdiv(N, tile_n) * tile_n
    if n_pad != N:
        logits = jnp.pad(logits, ((0, n_pad - N), (0, 0)))
        targets = jnp.pad(targets, ((0, n_pad - N), (0, 0)))

    per_sample = pl.pallas_call(
        partial(_focal_loss_kernel, alpha=float(alpha), gamma=float(gamma)),
        out_shape=jax.ShapeDtypeStruct((n_pad, 1), jnp.float32),
        grid_spec=pltpu.PrefetchScalarGridSpec(
            num_scalar_prefetch=0,
            grid=(n_pad // tile_n,),
            in_specs=[
                pl.BlockSpec((tile_n, C), lambda i: (i, 0)),   # logits tile
                pl.BlockSpec((tile_n, 1), lambda i: (i, 0)),   # target ids
            ],
            out_specs=pl.BlockSpec((tile_n, 1), lambda i: (i, 0)),
        ),
        compiler_params=pltpu.CompilerParams(dimension_semantics=("parallel",)),
    )(logits, targets)

    return per_sample[:N, 0]


def focal_loss(logits, targets, *, alpha=0.25, gamma=2.0, reduction="mean"):
    fl = focal_loss_per_sample(logits, targets, alpha=alpha, gamma=gamma)
    if reduction == "mean":
        return fl.mean()
    if reduction == "sum":
        return fl.sum()
    return fl


class FocalLoss:
    """Mirror of the PyTorch nn.Module's forward()."""

    def __init__(self, alpha=0.25, gamma=2.0, reduction="mean"):
        self.alpha = alpha
        self.gamma = gamma
        self.reduction = reduction

    def __call__(self, logits, targets):
        return focal_loss(
            logits, targets, alpha=self.alpha, gamma=self.gamma, reduction=self.reduction
        )


# ----------------------------------------------------------------------------
# Reference (plain JAX) implementation for correctness checking.
# ----------------------------------------------------------------------------
def _ref_focal_loss(logits, targets, alpha, gamma, reduction):
    logp = jax.nn.log_softmax(logits.astype(jnp.float32), axis=-1)
    ce = -jnp.take_along_axis(logp, targets.astype(jnp.int32)[:, None], axis=-1)[:, 0]
    pt = jnp.exp(-ce)
    fl = alpha * (1.0 - pt) ** gamma * ce
    if reduction == "mean":
        return fl.mean()
    if reduction == "sum":
        return fl.sum()
    return fl


# ----------------------------------------------------------------------------
# Demo / test
# ----------------------------------------------------------------------------
if __name__ == "__main__":
    N, C = 200, 32                      # batch not a tile multiple -> exercises padding
    key = jax.random.PRNGKey(0)
    k_logits, k_tgt = jax.random.split(key)
    logits = jax.random.normal(k_logits, (N, C), jnp.float32) * 2.0
    targets = jax.random.randint(k_tgt, (N,), 0, C, jnp.int32)

    crit = FocalLoss(alpha=0.25, gamma=2.0, reduction="mean")
    loss = jax.block_until_ready(crit(logits, targets))

    # Check all three reductions against the plain-JAX reference.
    for red in ("mean", "sum", "none"):
        got = jax.block_until_ready(
            focal_loss(logits, targets, alpha=0.25, gamma=2.0, reduction=red)
        )
        ref = _ref_focal_loss(logits, targets, 0.25, 2.0, red)
        assert jnp.allclose(got, ref, atol=1e-5, rtol=1e-4), f"mismatch (reduction={red})"

    # Non-default gamma path (jnp.power branch).
    got = jax.block_until_ready(
        focal_loss(logits, targets, alpha=0.5, gamma=1.5, reduction="mean")
    )
    ref = _ref_focal_loss(logits, targets, 0.5, 1.5, "mean")
    assert jnp.allclose(got, ref, atol=1e-5, rtol=1e-4), "mismatch (gamma=1.5)"

    # bf16 logits path (native-dtype DMA, in-kernel f32 upcast).
    logits_bf16 = logits.astype(jnp.bfloat16)
    got = jax.block_until_ready(
        focal_loss(logits_bf16, targets, alpha=0.25, gamma=2.0, reduction="mean")
    )
    ref = _ref_focal_loss(logits_bf16.astype(jnp.float32), targets, 0.25, 2.0, "mean")
    assert jnp.allclose(got, ref, atol=1e-5, rtol=1e-4), "mismatch (bf16 logits)"

    # Multi-tile grid path (forces several grid steps with a small tile).
    got = jax.block_until_ready(
        focal_loss_per_sample(logits, targets, alpha=0.25, gamma=2.0, tile_n=64)
    )
    ref = _ref_focal_loss(logits, targets, 0.25, 2.0, "none")
    assert jnp.allclose(got, ref, atol=1e-5, rtol=1e-4), "mismatch (multi-tile)"

    print("KERNEL_OK")
</pallas_src>

<mosaic_0001>
module attributes {stable_mosaic.version = 11 : i64} {
  func.func @_focal_loss_kernel(%arg0: i32, %arg1: memref<200x32xf32, #tpu.memory_space<vmem>>, %arg2: memref<200x1xi32, #tpu.memory_space<vmem>>, %arg3: memref<200x1xf32, #tpu.memory_space<vmem>>) attributes {dimension_semantics = [#tpu.dimension_semantics<parallel>], iteration_bounds = array<i64: 1>, scalar_prefetch = 0 : i64, scratch_operands = 0 : i64, tpu.core_type = #tpu.core_type<tc>, window_params = [{transform_indices = @transform_0, window_bounds = array<i64: 200, 32>}, {transform_indices = @transform_1, window_bounds = array<i64: 200, 1>}, {transform_indices = @transform_2, window_bounds = array<i64: 200, 1>}]} {
    %c0 = arith.constant 0 : index
    %c0_0 = arith.constant 0 : index
    %0 = vector.load %arg1[%c0, %c0_0] : memref<200x32xf32, #tpu.memory_space<vmem>>, vector<200x32xf32>
    %c0_1 = arith.constant 0 : index
    %c0_2 = arith.constant 0 : index
    %1 = vector.load %arg2[%c0_1, %c0_2] : memref<200x1xi32, #tpu.memory_space<vmem>>, vector<200x1xi32>
    %cst = arith.constant dense<0xFF800000> : vector<200xf32>
    %2 = vector.multi_reduction <maximumf>, %0, %cst [1] : vector<200x32xf32> to vector<200xf32>
    %3 = vector.shape_cast %2 : vector<200xf32> to vector<200x1xf32>
    %4 = vector.broadcast %3 : vector<200x1xf32> to vector<200x32xf32>
    %5 = arith.subf %0, %4 : vector<200x32xf32>
    %6 = math.exp %5 : vector<200x32xf32>
    %cst_3 = arith.constant dense<0.000000e+00> : vector<200xf32>
    %7 = vector.multi_reduction <add>, %6, %cst_3 [1] : vector<200x32xf32> to vector<200xf32>
    %8 = vector.shape_cast %7 : vector<200xf32> to vector<200x1xf32>
    %9 = tpu.iota {dimensions = array<i32: 1>} : vector<200x32xi32>
    %10 = vector.broadcast %1 : vector<200x1xi32> to vector<200x32xi32>
    %11 = arith.cmpi eq, %9, %10 : vector<200x32xi32>
    %cst_4 = arith.constant 0.000000e+00 : f32
    %12 = vector.broadcast %cst_4 : f32 to vector<200x32xf32>
    %13 = arith.select %11, %5, %12 : vector<200x32xi1>, vector<200x32xf32>
    %cst_5 = arith.constant dense<0.000000e+00> : vector<200xf32>
    %14 = vector.multi_reduction <add>, %13, %cst_5 [1] : vector<200x32xf32> to vector<200xf32>
    %15 = vector.shape_cast %14 : vector<200xf32> to vector<200x1xf32>
    %cst_6 = arith.constant 0.000000e+00 : f32
    %16 = vector.broadcast %cst_6 : f32 to vector<200x32xf32>
    %17 = arith.select %11, %6, %16 : vector<200x32xi1>, vector<200x32xf32>
    %cst_7 = arith.constant dense<0.000000e+00> : vector<200xf32>
    %18 = vector.multi_reduction <add>, %17, %cst_7 [1] : vector<200x32xf32> to vector<200xf32>
    %19 = vector.shape_cast %18 : vector<200xf32> to vector<200x1xf32>
    %20 = math.log %8 : vector<200x1xf32>
    %21 = arith.subf %20, %15 : vector<200x1xf32>
    %22 = arith.divf %19, %8 : vector<200x1xf32>
    %cst_8 = arith.constant 1.000000e+00 : f32
    %23 = vector.broadcast %cst_8 : f32 to vector<200x1xf32>
    %24 = arith.subf %23, %22 : vector<200x1xf32>
    %25 = arith.mulf %24, %24 : vector<200x1xf32>
    %cst_9 = arith.constant 2.500000e-01 : f32
    %26 = vector.broadcast %cst_9 : f32 to vector<200x1xf32>
    %27 = arith.mulf %26, %25 : vector<200x1xf32>
    %28 = arith.mulf %27, %21 : vector<200x1xf32>
    %c0_10 = arith.constant 0 : index
    %c0_11 = arith.constant 0 : index
    %29 = vector.load %arg3[%c0_10, %c0_11] : memref<200x1xf32, #tpu.memory_space<vmem>>, vector<200x1xf32>
    tpu.vector_store %arg3[%c0_10, %c0_11], %28 {strides = array<i32>} : memref<200x1xf32, #tpu.memory_space<vmem>>, vector<200x1xf32>,
    return
  }
  func.func @transform_0(%arg0: i32) -> (i32, i32) {
    %c0_i32 = arith.constant 0 : i32
    %c0_i32_0 = arith.constant 0 : i32
    return %arg0, %c0_i32 : i32, i32
  }
  func.func @transform_1(%arg0: i32) -> (i32, i32) {
    %c0_i32 = arith.constant 0 : i32
    %c0_i32_0 = arith.constant 0 : i32
    return %arg0, %c0_i32 : i32, i32
  }
  func.func @transform_2(%arg0: i32) -> (i32, i32) {
    %c0_i32 = arith.constant 0 : i32
    %c0_i32_0 = arith.constant 0 : i32
    return %arg0, %c0_i32 : i32, i32
  }
}

</mosaic_0001>

<llo_original>
// kernel: tpu_custom_call.1
$region0: #{tpu_custom_call.1}
  #allocation0 [shape = 'u32[]', space=smem, size = 0x4, offset = 0x4, fixed_abs, tag = 'smem constant byte address 0x4 - core index']
  #allocation1 [shape = 'u32[144,128]{1,0:T(1,128)}', space=vmem, size = 0x12000, scoped, tag = 'internal scratch']
  %s0 = inlined_call_operand.vmem [shape: f32[200,32], index: 0, kind: input, shape index: {}]
  %s1 = inlined_call_operand.vmem [shape: s32[200,1], index: 1, kind: input, shape index: {}]
  %s2 = inlined_call_operand.vmem [shape: f32[200,1], index: 2, kind: output, shape index: {}]
  %s3 = sld [smem:[#allocation0]]
  $region18: #{tpu_custom_call.1} parent=0
    _
  %s5 = ssub.s32 1, %s3
  %s6 = scalar_select 0, %s5, %s3
  // Predicated region
  $region2: #{tpu_custom_call.1} parent=0 // pred_check
    _
  $region3: #{tpu_custom_call.1} parent=0 // pred_check_branch
    %8 = sbr.rel (0) target = $region5
  $region4: #{tpu_custom_call.1} parent=0 // pred_region
    _
  $region5: #{tpu_custom_call.1} parent=0 // pred_fallthru
    _
  // Predicated region
  $region6: #{tpu_custom_call.1} parent=0 // pred_check
    _
  $region7: #{tpu_custom_call.1} parent=0 // pred_check_branch
    %10 = sbr.rel (0) target = $region9
  $region8: #{tpu_custom_call.1} parent=0 // pred_region
    _
  $region9: #{tpu_custom_call.1} parent=0 // pred_fallthru
    _
  %v11 = vld [vmem:[%s0] sm:$0xff]
  %v12 = vld [vmem:[%s0 + $0x8] sm:$0xff]
  %v13 = vld [vmem:[%s0 + $0x10] sm:$0xff]
  %v14 = vld [vmem:[%s0 + $0x18] sm:$0xff]
  %v15 = vld [vmem:[%s0 + $0x20] sm:$0xff]
  %v16 = vld [vmem:[%s0 + $0x28] sm:$0xff]
  %v17 = vld [vmem:[%s0 + $0x30] sm:$0xff]
  %v18 = vld [vmem:[%s0 + $0x38] sm:$0xff]
  %v19 = vld [vmem:[%s0 + $0x40] sm:$0xff]
  %v20 = vld [vmem:[%s0 + $0x48] sm:$0xff]
  %v21 = vld [vmem:[%s0 + $0x50] sm:$0xff]
  %v22 = vld [vmem:[%s0 + $0x58] sm:$0xff]
  %v23 = vld [vmem:[%s0 + $0x60] sm:$0xff]
  %v24 = vld [vmem:[%s0 + $0x68] sm:$0xff]
  %v25 = vld [vmem:[%s0 + $0x70] sm:$0xff]
  %v26 = vld [vmem:[%s0 + $0x78] sm:$0xff]
  %v27 = vld [vmem:[%s0 + $0x80] sm:$0xff]
  %v28 = vld [vmem:[%s0 + $0x88] sm:$0xff]
  %v29 = vld [vmem:[%s0 + $0x90] sm:$0xff]
  %v30 = vld [vmem:[%s0 + $0x98] sm:$0xff]
  %v31 = vld [vmem:[%s0 + $0xa0] sm:$0xff]
  %v32 = vld [vmem:[%s0 + $0xa8] sm:$0xff]
  %v33 = vld [vmem:[%s0 + $0xb0] sm:$0xff]
  %v34 = vld [vmem:[%s0 + $0xb8] sm:$0xff]
  %v35 = vld [vmem:[%s0 + $0xc0] sm:$0xff]
  %v36 = vld [vmem:[%s1] sm:$0xff]
  %v37 = vld [vmem:[%s1 + $0x8] sm:$0xff]
  %v38 = vld [vmem:[%s1 + $0x10] sm:$0xff]
  %v39 = vld [vmem:[%s1 + $0x18] sm:$0xff]
  %v40 = vld [vmem:[%s1 + $0x20] sm:$0xff]
  %v41 = vld [vmem:[%s1 + $0x28] sm:$0xff]
  %v42 = vld [vmem:[%s1 + $0x30] sm:$0xff]
  %v43 = vld [vmem:[%s1 + $0x38] sm:$0xff]
  %v44 = vld [vmem:[%s1 + $0x40] sm:$0xff]
  %v45 = vld [vmem:[%s1 + $0x48] sm:$0xff]
  %v46 = vld [vmem:[%s1 + $0x50] sm:$0xff]
  %v47 = vld [vmem:[%s1 + $0x58] sm:$0xff]
  %v48 = vld [vmem:[%s1 + $0x60] sm:$0xff]
  %v49 = vld [vmem:[%s1 + $0x68] sm:$0xff]
  %v50 = vld [vmem:[%s1 + $0x70] sm:$0xff]
  %v51 = vld [vmem:[%s1 + $0x78] sm:$0xff]
  %v52 = vld [vmem:[%s1 + $0x80] sm:$0xff]
  %v53 = vld [vmem:[%s1 + $0x88] sm:$0xff]
  %v54 = vld [vmem:[%s1 + $0x90] sm:$0xff]
  %v55 = vld [vmem:[%s1 + $0x98] sm:$0xff]
  %v56 = vld [vmem:[%s1 + $0xa0] sm:$0xff]
  %v57 = vld [vmem:[%s1 + $0xa8] sm:$0xff]
  %v58 = vld [vmem:[%s1 + $0xb0] sm:$0xff]
  %v59 = vld [vmem:[%s1 + $0xb8] sm:$0xff]
  %v60 = vld [vmem:[%s1 + $0xc0] sm:$0xff]
  %vm61 = vcmask 261120
  %v62 = vsel %vm61, %v11, -inf
  %63 = vmax.xlane.f32.xlu0 %v62
  %v64 = vpop.xlane.xlu0 %63
  %v65 = vsel %vm61, %v12, -inf
  %66 = vmax.xlane.f32.xlu0 %v65
  %v67 = vpop.xlane.xlu0 %66
  %v68 = vsel %vm61, %v13, -inf
  %69 = vmax.xlane.f32.xlu0 %v68
  %v70 = vpop.xlane.xlu0 %69
  %v71 = vsel %vm61, %v14, -inf
  %72 = vmax.xlane.f32.xlu0 %v71
  %v73 = vpop.xlane.xlu0 %72
  %v74 = vsel %vm61, %v15, -inf
  %75 = vmax.xlane.f32.xlu0 %v74
  %v76 = vpop.xlane.xlu0 %75
  %v77 = vsel %vm61, %v16, -inf
  %78 = vmax.xlane.f32.xlu0 %v77
  %v79 = vpop.xlane.xlu0 %78
  %v80 = vsel %vm61, %v17, -inf
  %81 = vmax.xlane.f32.xlu0 %v80
  %v82 = vpop.xlane.xlu0 %81
  %v83 = vsel %vm61, %v18, -inf
  %84 = vmax.xlane.f32.xlu0 %v83
  %v85 = vpop.xlane.xlu0 %84
  %v86 = vsel %vm61, %v19, -inf
  %87 = vmax.xlane.f32.xlu0 %v86
  %v88 = vpop.xlane.xlu0 %87
  %v89 = vsel %vm61, %v20, -inf
  %90 = vmax.xlane.f32.xlu0 %v89
  %v91 = vpop.xlane.xlu0 %90
  %v92 = vsel %vm61, %v21, -inf
  %93 = vmax.xlane.f32.xlu0 %v92
  %v94 = vpop.xlane.xlu0 %93
  %v95 = vsel %vm61, %v22, -inf
  %96 = vmax.xlane.f32.xlu0 %v95
  %v97 = vpop.xlane.xlu0 %96
  %v98 = vsel %vm61, %v23, -inf
  %99 = vmax.xlane.f32.xlu0 %v98
  %v100 = vpop.xlane.xlu0 %99
  %v101 = vsel %vm61, %v24, -inf
  %102 = vmax.xlane.f32.xlu0 %v101
  %v103 = vpop.xlane.xlu0 %102
  %v104 = vsel %vm61, %v25, -inf
  %105 = vmax.xlane.f32.xlu0 %v104
  %v106 = vpop.xlane.xlu0 %105
  %v107 = vsel %vm61, %v26, -inf
  %108 = vmax.xlane.f32.xlu0 %v107
  %v109 = vpop.xlane.xlu0 %108
  %v110 = vsel %vm61, %v27, -inf
  %111 = vmax.xlane.f32.xlu0 %v110
  %v112 = vpop.xlane.xlu0 %111
  %v113 = vsel %vm61, %v28, -inf
  %114 = vmax.xlane.f32.xlu0 %v113
  %v115 = vpop.xlane.xlu0 %114
  %v116 = vsel %vm61, %v29, -inf
  %117 = vmax.xlane.f32.xlu0 %v116
  %v118 = vpop.xlane.xlu0 %117
  %v119 = vsel %vm61, %v30, -inf
  %120 = vmax.xlane.f32.xlu0 %v119
  %v121 = vpop.xlane.xlu0 %120
  %v122 = vsel %vm61, %v31, -inf
  %123 = vmax.xlane.f32.xlu0 %v122
  %v124 = vpop.xlane.xlu0 %123
  %v125 = vsel %vm61, %v32, -inf
  %126 = vmax.xlane.f32.xlu0 %v125
  %v127 = vpop.xlane.xlu0 %126
  %v128 = vsel %vm61, %v33, -inf
  %129 = vmax.xlane.f32.xlu0 %v128
  %v130 = vpop.xlane.xlu0 %129
  %v131 = vsel %vm61, %v34, -inf
  %132 = vmax.xlane.f32.xlu0 %v131
  %v133 = vpop.xlane.xlu0 %132
  %v134 = vsel %vm61, %v35, -inf
  %135 = vmax.xlane.f32.xlu0 %v134
  %v136 = vpop.xlane.xlu0 %135
  %v137 = vsub.f32 %v11, %v64
  %v138 = vsub.f32 %v12, %v67
  %v139 = vsub.f32 %v13, %v70
  %v140 = vsub.f32 %v14, %v73
  %v141 = vsub.f32 %v15, %v76
  %v142 = vsub.f32 %v16, %v79
  %v143 = vsub.f32 %v17, %v82
  %v144 = vsub.f32 %v18, %v85
  %v145 = vsub.f32 %v19, %v88
  %v146 = vsub.f32 %v20, %v91
  %v147 = vsub.f32 %v21, %v94
  %v148 = vsub.f32 %v22, %v97
  %v149 = vsub.f32 %v23, %v100
  %v150 = vsub.f32 %v24, %v103
  %v151 = vsub.f32 %v25, %v106
  %v152 = vsub.f32 %v26, %v109
  %v153 = vsub.f32 %v27, %v112
  %v154 = vsub.f32 %v28, %v115
  %v155 = vsub.f32 %v29, %v118
  %v156 = vsub.f32 %v30, %v121
  %v157 = vsub.f32 %v31, %v124
  %v158 = vsub.f32 %v32, %v127
  %v159 = vsub.f32 %v33, %v130
  %v160 = vsub.f32 %v34, %v133
  %v161 = vsub.f32 %v35, %v136
  %v162 = vmul.f32 %v137, 1.442695
  %v163 = vpow.pop %v162
  %v164 = vmul.f32 %v138, 1.442695
  %v165 = vpow.pop %v164
  %v166 = vmul.f32 %v139, 1.442695
  %v167 = vpow.pop %v166
  %v168 = vmul.f32 %v140, 1.442695
  %v169 = vpow.pop %v168
  %v170 = vmul.f32 %v141, 1.442695
  %v171 = vpow.pop %v170
  %v172 = vmul.f32 %v142, 1.442695
  %v173 = vpow.pop %v172
  %v174 = vmul.f32 %v143, 1.442695
  %v175 = vpow.pop %v174
  %v176 = vmul.f32 %v144, 1.442695
  %v177 = vpow.pop %v176
  %v178 = vmul.f32 %v145, 1.442695
  %v179 = vpow.pop %v178
  %v180 = vmul.f32 %v146, 1.442695
  %v181 = vpow.pop %v180
  %v182 = vmul.f32 %v147, 1.442695
  %v183 = vpow.pop %v182
  %v184 = vmul.f32 %v148, 1.442695
  %v185 = vpow.pop %v184
  %v186 = vmul.f32 %v149, 1.442695
  %v187 = vpow.pop %v186
  %v188 = vmul.f32 %v150, 1.442695
  %v189 = vpow.pop %v188
  %v190 = vmul.f32 %v151, 1.442695
  %v191 = vpow.pop %v190
  %v192 = vmul.f32 %v152, 1.442695
  %v193 = vpow.pop %v192
  %v194 = vmul.f32 %v153, 1.442695
  %v195 = vpow.pop %v194
  %v196 = vmul.f32 %v154, 1.442695
  %v197 = vpow.pop %v196
  %v198 = vmul.f32 %v155, 1.442695
  %v199 = vpow.pop %v198
  %v200 = vmul.f32 %v156, 1.442695
  %v201 = vpow.pop %v200
  %v202 = vmul.f32 %v157, 1.442695
  %v203 = vpow.pop %v202
  %v204 = vmul.f32 %v158, 1.442695
  %v205 = vpow.pop %v204
  %v206 = vmul.f32 %v159, 1.442695
  %v207 = vpow.pop %v206
  %v208 = vmul.f32 %v160, 1.442695
  %v209 = vpow.pop %v208
  %v210 = vmul.f32 %v161, 1.442695
  %v211 = vpow.pop %v210
  %v212 = vsel %vm61, %v163, 0.0
  %213 = vadd.xlane.f32.xlu0 %v212
  %v214 = vpop.xlane.xlu0 %213
  %v215 = vsel %vm61, %v165, 0.0
  %216 = vadd.xlane.f32.xlu0 %v215
  %v217 = vpop.xlane.xlu0 %216
  %v218 = vsel %vm61, %v167, 0.0
  %219 = vadd.xlane.f32.xlu0 %v218
  %v220 = vpop.xlane.xlu0 %219
  %v221 = vsel %vm61, %v169, 0.0
  %222 = vadd.xlane.f32.xlu0 %v221
  %v223 = vpop.xlane.xlu0 %222
  %v224 = vsel %vm61, %v171, 0.0
  %225 = vadd.xlane.f32.xlu0 %v224
  %v226 = vpop.xlane.xlu0 %225
  %v227 = vsel %vm61, %v173, 0.0
  %228 = vadd.xlane.f32.xlu0 %v227
  %v229 = vpop.xlane.xlu0 %228
  %v230 = vsel %vm61, %v175, 0.0
  %231 = vadd.xlane.f32.xlu0 %v230
  %v232 = vpop.xlane.xlu0 %231
  %v233 = vsel %vm61, %v177, 0.0
  %234 = vadd.xlane.f32.xlu0 %v233
  %v235 = vpop.xlane.xlu0 %234
  %v236 = vsel %vm61, %v179, 0.0
  %237 = vadd.xlane.f32.xlu0 %v236
  %v238 = vpop.xlane.xlu0 %237
  %v239 = vsel %vm61, %v181, 0.0
  %240 = vadd.xlane.f32.xlu0 %v239
  %v241 = vpop.xlane.xlu0 %240
  %v242 = vsel %vm61, %v183, 0.0
  %243 = vadd.xlane.f32.xlu0 %v242
  %v244 = vpop.xlane.xlu0 %243
  %v245 = vsel %vm61, %v185, 0.0
  %246 = vadd.xlane.f32.xlu0 %v245
  %v247 = vpop.xlane.xlu0 %246
  %v248 = vsel %vm61, %v187, 0.0
  %249 = vadd.xlane.f32.xlu0 %v248
  %v250 = vpop.xlane.xlu0 %249
  %v251 = vsel %vm61, %v189, 0.0
  %252 = vadd.xlane.f32.xlu0 %v251
  %v253 = vpop.xlane.xlu0 %252
  %v254 = vsel %vm61, %v191, 0.0
  %255 = vadd.xlane.f32.xlu0 %v254
  %v256 = vpop.xlane.xlu0 %255
  %v257 = vsel %vm61, %v193, 0.0
  %258 = vadd.xlane.f32.xlu0 %v257
  %v259 = vpop.xlane.xlu0 %258
  %v260 = vsel %vm61, %v195, 0.0
  %261 = vadd.xlane.f32.xlu0 %v260
  %v262 = vpop.xlane.xlu0 %261
  %v263 = vsel %vm61, %v197, 0.0
  %264 = vadd.xlane.f32.xlu0 %v263
  %v265 = vpop.xlane.xlu0 %264
  %v266 = vsel %vm61, %v199, 0.0
  %267 = vadd.xlane.f32.xlu0 %v266
  %v268 = vpop.xlane.xlu0 %267
  %v269 = vsel %vm61, %v201, 0.0
  %270 = vadd.xlane.f32.xlu0 %v269
  %v271 = vpop.xlane.xlu0 %270
  %v272 = vsel %vm61, %v203, 0.0
  %273 = vadd.xlane.f32.xlu0 %v272
  %v274 = vpop.xlane.xlu0 %273
  %v275 = vsel %vm61, %v205, 0.0
  %276 = vadd.xlane.f32.xlu0 %v275
  %v277 = vpop.xlane.xlu0 %276
  %v278 = vsel %vm61, %v207, 0.0
  %279 = vadd.xlane.f32.xlu0 %v278
  %v280 = vpop.xlane.xlu0 %279
  %v281 = vsel %vm61, %v209, 0.0
  %282 = vadd.xlane.f32.xlu0 %v281
  %v283 = vpop.xlane.xlu0 %282
  %v284 = vsel %vm61, %v211, 0.0
  %285 = vadd.xlane.f32.xlu0 %v284
  %v286 = vpop.xlane.xlu0 %285
  %v287 = vlaneseq
  %v288 = vand.u32 %v287, 127
  %289 = vset.pattern.permute.xlu0 0
  %290 = vperm.xlu0 %289, %v36
  %v291 = vpop.permute.xlu0 %290
  %292 = vset.pattern.permute.xlu0 0
  %293 = vperm.xlu0 %292, %v37
  %v294 = vpop.permute.xlu0 %293
  %295 = vset.pattern.permute.xlu0 0
  %296 = vperm.xlu0 %295, %v38
  %v297 = vpop.permute.xlu0 %296
  %298 = vset.pattern.permute.xlu0 0
  %299 = vperm.xlu0 %298, %v39
  %v300 = vpop.permute.xlu0 %299
  %301 = vset.pattern.permute.xlu0 0
  %302 = vperm.xlu0 %301, %v40
  %v303 = vpop.permute.xlu0 %302
  %304 = vset.pattern.permute.xlu0 0
  %305 = vperm.xlu0 %304, %v41
  %v306 = vpop.permute.xlu0 %305
  %307 = vset.pattern.permute.xlu0 0
  %308 = vperm.xlu0 %307, %v42
  %v309 = vpop.permute.xlu0 %308
  %310 = vset.pattern.permute.xlu0 0
  %311 = vperm.xlu0 %310, %v43
  %v312 = vpop.permute.xlu0 %311
  %313 = vset.pattern.permute.xlu0 0
  %314 = vperm.xlu0 %313, %v44
  %v315 = vpop.permute.xlu0 %314
  %316 = vset.pattern.permute.xlu0 0
  %317 = vperm.xlu0 %316, %v45
  %v318 = vpop.permute.xlu0 %317
  %319 = vset.pattern.permute.xlu0 0
  %320 = vperm.xlu0 %319, %v46
  %v321 = vpop.permute.xlu0 %320
  %322 = vset.pattern.permute.xlu0 0
  %323 = vperm.xlu0 %322, %v47
  %v324 = vpop.permute.xlu0 %323
  %325 = vset.pattern.permute.xlu0 0
  %326 = vperm.xlu0 %325, %v48
  %v327 = vpop.permute.xlu0 %326
  %328 = vset.pattern.permute.xlu0 0
  %329 = vperm.xlu0 %328, %v49
  %v330 = vpop.permute.xlu0 %329
  %331 = vset.pattern.permute.xlu0 0
  %332 = vperm.xlu0 %331, %v50
  %v333 = vpop.permute.xlu0 %332
  %334 = vset.pattern.permute.xlu0 0
  %335 = vperm.xlu0 %334, %v51
  %v336 = vpop.permute.xlu0 %335
  %337 = vset.pattern.permute.xlu0 0
  %338 = vperm.xlu0 %337, %v52
  %v339 = vpop.permute.xlu0 %338
  %340 = vset.pattern.permute.xlu0 0
  %341 = vperm.xlu0 %340, %v53
  %v342 = vpop.permute.xlu0 %341
  %343 = vset.pattern.permute.xlu0 0
  %344 = vperm.xlu0 %343, %v54
  %v345 = vpop.permute.xlu0 %344
  %346 = vset.pattern.permute.xlu0 0
  %347 = vperm.xlu0 %346, %v55
  %v348 = vpop.permute.xlu0 %347
  %349 = vset.pattern.permute.xlu0 0
  %350 = vperm.xlu0 %349, %v56
  %v351 = vpop.permute.xlu0 %350
  %352 = vset.pattern.permute.xlu0 0
  %353 = vperm.xlu0 %352, %v57
  %v354 = vpop.permute.xlu0 %353
  %355 = vset.pattern.permute.xlu0 0
  %356 = vperm.xlu0 %355, %v58
  %v357 = vpop.permute.xlu0 %356
  %358 = vset.pattern.permute.xlu0 0
  %359 = vperm.xlu0 %358, %v59
  %v360 = vpop.permute.xlu0 %359
  %361 = vset.pattern.permute.xlu0 0
  %362 = vperm.xlu0 %361, %v60
  %v363 = vpop.permute.xlu0 %362
  %vm364 = vcmp.eq.s32.totalorder %v288, %v291
  %vm365 = vcmp.eq.s32.totalorder %v288, %v294
  %vm366 = vcmp.eq.s32.totalorder %v288, %v297
  %vm367 = vcmp.eq.s32.totalorder %v288, %v300
  %vm368 = vcmp.eq.s32.totalorder %v288, %v303
  %vm369 = vcmp.eq.s32.totalorder %v288, %v306
  %vm370 = vcmp.eq.s32.totalorder %v288, %v309
  %vm371 = vcmp.eq.s32.totalorder %v288, %v312
  %vm372 = vcmp.eq.s32.totalorder %v288, %v315
  %vm373 = vcmp.eq.s32.totalorder %v288, %v318
  %vm374 = vcmp.eq.s32.totalorder %v288, %v321
  %vm375 = vcmp.eq.s32.totalorder %v288, %v324
  %vm376 = vcmp.eq.s32.totalorder %v288, %v327
  %vm377 = vcmp.eq.s32.totalorder %v288, %v330
  %vm378 = vcmp.eq.s32.totalorder %v288, %v333
  %vm379 = vcmp.eq.s32.totalorder %v288, %v336
  %vm380 = vcmp.eq.s32.totalorder %v288, %v339
  %vm381 = vcmp.eq.s32.totalorder %v288, %v342
  %vm382 = vcmp.eq.s32.totalorder %v288, %v345
  %vm383 = vcmp.eq.s32.totalorder %v288, %v348
  %vm384 = vcmp.eq.s32.totalorder %v288, %v351
  %vm385 = vcmp.eq.s32.totalorder %v288, %v354
  %vm386 = vcmp.eq.s32.totalorder %v288, %v357
  %vm387 = vcmp.eq.s32.totalorder %v288, %v360
  %vm388 = vcmp.eq.s32.totalorder %v288, %v363
  %v389 = vsel %vm364, %v137, 0.0
  %v390 = vsel %vm365, %v138, 0.0
  %v391 = vsel %vm366, %v139, 0.0
  %v392 = vsel %vm367, %v140, 0.0
  %v393 = vsel %vm368, %v141, 0.0
  %v394 = vsel %vm369, %v142, 0.0
  %v395 = vsel %vm370, %v143, 0.0
  %v396 = vsel %vm371, %v144, 0.0
  %v397 = vsel %vm372, %v145, 0.0
  %v398 = vsel %vm373, %v146, 0.0
  %v399 = vsel %vm374, %v147, 0.0
  %v400 = vsel %vm375, %v148, 0.0
  %v401 = vsel %vm376, %v149, 0.0
  %v402 = vsel %vm377, %v150, 0.0
  %v403 = vsel %vm378, %v151, 0.0
  %v404 = vsel %vm379, %v152, 0.0
  %v405 = vsel %vm380, %v153, 0.0
  %v406 = vsel %vm381, %v154, 0.0
  %v407 = vsel %vm382, %v155, 0.0
  %v408 = vsel %vm383, %v156, 0.0
  %v409 = vsel %vm384, %v157, 0.0
  %v410 = vsel %vm385, %v158, 0.0
  %v411 = vsel %vm386, %v159, 0.0
  %v412 = vsel %vm387, %v160, 0.0
  %v413 = vsel %vm388, %v161, 0.0
  %v414 = vsel %vm61, %v389, 0.0
  %415 = vadd.xlane.f32.xlu0 %v414
  %v416 = vpop.xlane.xlu0 %415
  %v417 = vsel %vm61, %v390, 0.0
  %418 = vadd.xlane.f32.xlu0 %v417
  %v419 = vpop.xlane.xlu0 %418
  %v420 = vsel %vm61, %v391, 0.0
  %421 = vadd.xlane.f32.xlu0 %v420
  %v422 = vpop.xlane.xlu0 %421
  %v423 = vsel %vm61, %v392, 0.0
  %424 = vadd.xlane.f32.xlu0 %v423
  %v425 = vpop.xlane.xlu0 %424
  %v426 = vsel %vm61, %v393, 0.0
  %427 = vadd.xlane.f32.xlu0 %v426
  %v428 = vpop.xlane.xlu0 %427
  %v429 = vsel %vm61, %v394, 0.0
  %430 = vadd.xlane.f32.xlu0 %v429
  %v431 = vpop.xlane.xlu0 %430
  %v432 = vsel %vm61, %v395, 0.0
  %433 = vadd.xlane.f32.xlu0 %v432
  %v434 = vpop.xlane.xlu0 %433
  %v435 = vsel %vm61, %v396, 0.0
  %436 = vadd.xlane.f32.xlu0 %v435
  %v437 = vpop.xlane.xlu0 %436
  %v438 = vsel %vm61, %v397, 0.0
  %439 = vadd.xlane.f32.xlu0 %v438
  %v440 = vpop.xlane.xlu0 %439
  %v441 = vsel %vm61, %v398, 0.0
  %442 = vadd.xlane.f32.xlu0 %v441
  %v443 = vpop.xlane.xlu0 %442
  %v444 = vsel %vm61, %v399, 0.0
  %445 = vadd.xlane.f32.xlu0 %v444
  %v446 = vpop.xlane.xlu0 %445
  %v447 = vsel %vm61, %v400, 0.0
  %448 = vadd.xlane.f32.xlu0 %v447
  %v449 = vpop.xlane.xlu0 %448
  %v450 = vsel %vm61, %v401, 0.0
  %451 = vadd.xlane.f32.xlu0 %v450
  %v452 = vpop.xlane.xlu0 %451
  %v453 = vsel %vm61, %v402, 0.0
  %454 = vadd.xlane.f32.xlu0 %v453
  %v455 = vpop.xlane.xlu0 %454
  %v456 = vsel %vm61, %v403, 0.0
  %457 = vadd.xlane.f32.xlu0 %v456
  %v458 = vpop.xlane.xlu0 %457
  %v459 = vsel %vm61, %v404, 0.0
  %460 = vadd.xlane.f32.xlu0 %v459
  %v461 = vpop.xlane.xlu0 %460
  %v462 = vsel %vm61, %v405, 0.0
  %463 = vadd.xlane.f32.xlu0 %v462
  %v464 = vpop.xlane.xlu0 %463
  %v465 = vsel %vm61, %v406, 0.0
  %466 = vadd.xlane.f32.xlu0 %v465
  %v467 = vpop.xlane.xlu0 %466
  %v468 = vsel %vm61, %v407, 0.0
  %469 = vadd.xlane.f32.xlu0 %v468
  %v470 = vpop.xlane.xlu0 %469
  %v471 = vsel %vm61, %v408, 0.0
  %472 = vadd.xlane.f32.xlu0 %v471
  %v473 = vpop.xlane.xlu0 %472
  %v474 = vsel %vm61, %v409, 0.0
  %475 = vadd.xlane.f32.xlu0 %v474
  %v476 = vpop.xlane.xlu0 %475
  %v477 = vsel %vm61, %v410, 0.0
  %478 = vadd.xlane.f32.xlu0 %v477
  %v479 = vpop.xlane.xlu0 %478
  %v480 = vsel %vm61, %v411, 0.0
  %481 = vadd.xlane.f32.xlu0 %v480
  %v482 = vpop.xlane.xlu0 %481
  %v483 = vsel %vm61, %v412, 0.0
  %484 = vadd.xlane.f32.xlu0 %v483
  %v485 = vpop.xlane.xlu0 %484
  %v486 = vsel %vm61, %v413, 0.0
  %487 = vadd.xlane.f32.xlu0 %v486
  %v488 = vpop.xlane.xlu0 %487
  %v489 = vsel %vm364, %v163, 0.0
  %v490 = vsel %vm365, %v165, 0.0
  %v491 = vsel %vm366, %v167, 0.0
  %v492 = vsel %vm367, %v169, 0.0
  %v493 = vsel %vm368, %v171, 0.0
  %v494 = vsel %vm369, %v173, 0.0
  %v495 = vsel %vm370, %v175, 0.0
  %v496 = vsel %vm371, %v177, 0.0
  %v497 = vsel %vm372, %v179, 0.0
  %v498 = vsel %vm373, %v181, 0.0
  %v499 = vsel %vm374, %v183, 0.0
  %v500 = vsel %vm375, %v185, 0.0
  %v501 = vsel %vm376, %v187, 0.0
  %v502 = vsel %vm377, %v189, 0.0
  %v503 = vsel %vm378, %v191, 0.0
  %v504 = vsel %vm379, %v193, 0.0
  %v505 = vsel %vm380, %v195, 0.0
  %v506 = vsel %vm381, %v197, 0.0
  %v507 = vsel %vm382, %v199, 0.0
  %v508 = vsel %vm383, %v201, 0.0
  %v509 = vsel %vm384, %v203, 0.0
  %v510 = vsel %vm385, %v205, 0.0
  %v511 = vsel %vm386, %v207, 0.0
  %v512 = vsel %vm387, %v209, 0.0
  %v513 = vsel %vm388, %v211, 0.0
  %v514 = vsel %vm61, %v489, 0.0
  %515 = vadd.xlane.f32.xlu0 %v514
  %v516 = vpop.xlane.xlu0 %515
  %v517 = vsel %vm61, %v490, 0.0
  %518 = vadd.xlane.f32.xlu0 %v517
  %v519 = vpop.xlane.xlu0 %518
  %v520 = vsel %vm61, %v491, 0.0
  %521 = vadd.xlane.f32.xlu0 %v520
  %v522 = vpop.xlane.xlu0 %521
  %v523 = vsel %vm61, %v492, 0.0
  %524 = vadd.xlane.f32.xlu0 %v523
  %v525 = vpop.xlane.xlu0 %524
  %v526 = vsel %vm61, %v493, 0.0
  %527 = vadd.xlane.f32.xlu0 %v526
  %v528 = vpop.xlane.xlu0 %527
  %v529 = vsel %vm61, %v494, 0.0
  %530 = vadd.xlane.f32.xlu0 %v529
  %v531 = vpop.xlane.xlu0 %530
  %v532 = vsel %vm61, %v495, 0.0
  %533 = vadd.xlane.f32.xlu0 %v532
  %v534 = vpop.xlane.xlu0 %533
  %v535 = vsel %vm61, %v496, 0.0
  %536 = vadd.xlane.f32.xlu0 %v535
  %v537 = vpop.xlane.xlu0 %536
  %v538 = vsel %vm61, %v497, 0.0
  %539 = vadd.xlane.f32.xlu0 %v538
  %v540 = vpop.xlane.xlu0 %539
  %v541 = vsel %vm61, %v498, 0.0
  %542 = vadd.xlane.f32.xlu0 %v541
  %v543 = vpop.xlane.xlu0 %542
  %v544 = vsel %vm61, %v499, 0.0
  %545 = vadd.xlane.f32.xlu0 %v544
  %v546 = vpop.xlane.xlu0 %545
  %v547 = vsel %vm61, %v500, 0.0
  %548 = vadd.xlane.f32.xlu0 %v547
  %v549 = vpop.xlane.xlu0 %548
  %v550 = vsel %vm61, %v501, 0.0
  %551 = vadd.xlane.f32.xlu0 %v550
  %v552 = vpop.xlane.xlu0 %551
  %v553 = vsel %vm61, %v502, 0.0
  %554 = vadd.xlane.f32.xlu0 %v553
  %v555 = vpop.xlane.xlu0 %554
  %v556 = vsel %vm61, %v503, 0.0
  %557 = vadd.xlane.f32.xlu0 %v556
  %v558 = vpop.xlane.xlu0 %557
  %v559 = vsel %vm61, %v504, 0.0
  %560 = vadd.xlane.f32.xlu0 %v559
  %v561 = vpop.xlane.xlu0 %560
  %v562 = vsel %vm61, %v505, 0.0
  %563 = vadd.xlane.f32.xlu0 %v562
  %v564 = vpop.xlane.xlu0 %563
  %v565 = vsel %vm61, %v506, 0.0
  %566 = vadd.xlane.f32.xlu0 %v565
  %v567 = vpop.xlane.xlu0 %566
  %v568 = vsel %vm61, %v507, 0.0
  %569 = vadd.xlane.f32.xlu0 %v568
  %v570 = vpop.xlane.xlu0 %569
  %v571 = vsel %vm61, %v508, 0.0
  %572 = vadd.xlane.f32.xlu0 %v571
  %v573 = vpop.xlane.xlu0 %572
  %v574 = vsel %vm61, %v509, 0.0
  %575 = vadd.xlane.f32.xlu0 %v574
  %v576 = vpop.xlane.xlu0 %575
  %v577 = vsel %vm61, %v510, 0.0
  %578 = vadd.xlane.f32.xlu0 %v577
  %v579 = vpop.xlane.xlu0 %578
  %v580 = vsel %vm61, %v511, 0.0
  %581 = vadd.xlane.f32.xlu0 %v580
  %v582 = vpop.xlane.xlu0 %581
  %v583 = vsel %vm61, %v512, 0.0
  %584 = vadd.xlane.f32.xlu0 %v583
  %v585 = vpop.xlane.xlu0 %584
  %v586 = vsel %vm61, %v513, 0.0
  %587 = vadd.xlane.f32.xlu0 %v586
  %v588 = vpop.xlane.xlu0 %587
  %v589 = vlog2.pop %v214
  %v590 = vmul.f32 %v589, 0.6931472
  %v591 = vlog2.pop %v217
  %v592 = vmul.f32 %v591, 0.6931472
  %v593 = vlog2.pop %v220
  %v594 = vmul.f32 %v593, 0.6931472
  %v595 = vlog2.pop %v223
  %v596 = vmul.f32 %v595, 0.6931472
  %v597 = vlog2.pop %v226
  %v598 = vmul.f32 %v597, 0.6931472
  %v599 = vlog2.pop %v229
  %v600 = vmul.f32 %v599, 0.6931472
  %v601 = vlog2.pop %v232
  %v602 = vmul.f32 %v601, 0.6931472
  %v603 = vlog2.pop %v235
  %v604 = vmul.f32 %v603, 0.6931472
  %v605 = vlog2.pop %v238
  %v606 = vmul.f32 %v605, 0.6931472
  %v607 = vlog2.pop %v241
  %v608 = vmul.f32 %v607, 0.6931472
  %v609 = vlog2.pop %v244
  %v610 = vmul.f32 %v609, 0.6931472
  %v611 = vlog2.pop %v247
  %v612 = vmul.f32 %v611, 0.6931472
  %v613 = vlog2.pop %v250
  %v614 = vmul.f32 %v613, 0.6931472
  %v615 = vlog2.pop %v253
  %v616 = vmul.f32 %v615, 0.6931472
  %v617 = vlog2.pop %v256
  %v618 = vmul.f32 %v617, 0.6931472
  %v619 = vlog2.pop %v259
  %v620 = vmul.f32 %v619, 0.6931472
  %v621 = vlog2.pop %v262
  %v622 = vmul.f32 %v621, 0.6931472
  %v623 = vlog2.pop %v265
  %v624 = vmul.f32 %v623, 0.6931472
  %v625 = vlog2.pop %v268
  %v626 = vmul.f32 %v625, 0.6931472
  %v627 = vlog2.pop %v271
  %v628 = vmul.f32 %v627, 0.6931472
  %v629 = vlog2.pop %v274
  %v630 = vmul.f32 %v629, 0.6931472
  %v631 = vlog2.pop %v277
  %v632 = vmul.f32 %v631, 0.6931472
  %v633 = vlog2.pop %v280
  %v634 = vmul.f32 %v633, 0.6931472
  %v635 = vlog2.pop %v283
  %v636 = vmul.f32 %v635, 0.6931472
  %v637 = vlog2.pop %v286
  %v638 = vmul.f32 %v637, 0.6931472
  %v639 = vsub.f32 %v590, %v416
  %v640 = vsub.f32 %v592, %v419
  %v641 = vsub.f32 %v594, %v422
  %v642 = vsub.f32 %v596, %v425
  %v643 = vsub.f32 %v598, %v428
  %v644 = vsub.f32 %v600, %v431
  %v645 = vsub.f32 %v602, %v434
  %v646 = vsub.f32 %v604, %v437
  %v647 = vsub.f32 %v606, %v440
  %v648 = vsub.f32 %v608, %v443
  %v649 = vsub.f32 %v610, %v446
  %v650 = vsub.f32 %v612, %v449
  %v651 = vsub.f32 %v614, %v452
  %v652 = vsub.f32 %v616, %v455
  %v653 = vsub.f32 %v618, %v458
  %v654 = vsub.f32 %v620, %v461
  %v655 = vsub.f32 %v622, %v464
  %v656 = vsub.f32 %v624, %v467
  %v657 = vsub.f32 %v626, %v470
  %v658 = vsub.f32 %v628, %v473
  %v659 = vsub.f32 %v630, %v476
  %v660 = vsub.f32 %v632, %v479
  %v661 = vsub.f32 %v634, %v482
  %v662 = vsub.f32 %v636, %v485
  %v663 = vsub.f32 %v638, %v488
  %v664 = vrcp.pop %v214
  %v665 = vmul.f32 %v516, %v664
  %v666 = vrcp.pop %v217
  %v667 = vmul.f32 %v519, %v666
  %v668 = vrcp.pop %v220
  %v669 = vmul.f32 %v522, %v668
  %v670 = vrcp.pop %v223
  %v671 = vmul.f32 %v525, %v670
  %v672 = vrcp.pop %v226
  %v673 = vmul.f32 %v528, %v672
  %v674 = vrcp.pop %v229
  %v675 = vmul.f32 %v531, %v674
  %v676 = vrcp.pop %v232
  %v677 = vmul.f32 %v534, %v676
  %v678 = vrcp.pop %v235
  %v679 = vmul.f32 %v537, %v678
  %v680 = vrcp.pop %v238
  %v681 = vmul.f32 %v540, %v680
  %v682 = vrcp.pop %v241
  %v683 = vmul.f32 %v543, %v682
  %v684 = vrcp.pop %v244
  %v685 = vmul.f32 %v546, %v684
  %v686 = vrcp.pop %v247
  %v687 = vmul.f32 %v549, %v686
  %v688 = vrcp.pop %v250
  %v689 = vmul.f32 %v552, %v688
  %v690 = vrcp.pop %v253
  %v691 = vmul.f32 %v555, %v690
  %v692 = vrcp.pop %v256
  %v693 = vmul.f32 %v558, %v692
  %v694 = vrcp.pop %v259
  %v695 = vmul.f32 %v561, %v694
  %v696 = vrcp.pop %v262
  %v697 = vmul.f32 %v564, %v696
  %v698 = vrcp.pop %v265
  %v699 = vmul.f32 %v567, %v698
  %v700 = vrcp.pop %v268
  %v701 = vmul.f32 %v570, %v700
  %v702 = vrcp.pop %v271
  %v703 = vmul.f32 %v573, %v702
  %v704 = vrcp.pop %v274
  %v705 = vmul.f32 %v576, %v704
  %v706 = vrcp.pop %v277
  %v707 = vmul.f32 %v579, %v706
  %v708 = vrcp.pop %v280
  %v709 = vmul.f32 %v582, %v708
  %v710 = vrcp.pop %v283
  %v711 = vmul.f32 %v585, %v710
  %v712 = vrcp.pop %v286
  %v713 = vmul.f32 %v588, %v712
  %v714 = vsub.f32 1.0, %v665
  %v715 = vsub.f32 1.0, %v667
  %v716 = vsub.f32 1.0, %v669
  %v717 = vsub.f32 1.0, %v671
  %v718 = vsub.f32 1.0, %v673
  %v719 = vsub.f32 1.0, %v675
  %v720 = vsub.f32 1.0, %v677
  %v721 = vsub.f32 1.0, %v679
  %v722 = vsub.f32 1.0, %v681
  %v723 = vsub.f32 1.0, %v683
  %v724 = vsub.f32 1.0, %v685
  %v725 = vsub.f32 1.0, %v687
  %v726 = vsub.f32 1.0, %v689
  %v727 = vsub.f32 1.0, %v691
  %v728 = vsub.f32 1.0, %v693
  %v729 = vsub.f32 1.0, %v695
  %v730 = vsub.f32 1.0, %v697
  %v731 = vsub.f32 1.0, %v699
  %v732 = vsub.f32 1.0, %v701
  %v733 = vsub.f32 1.0, %v703
  %v734 = vsub.f32 1.0, %v705
  %v735 = vsub.f32 1.0, %v707
  %v736 = vsub.f32 1.0, %v709
  %v737 = vsub.f32 1.0, %v711
  %v738 = vsub.f32 1.0, %v713
  %v739 = vmul.f32 %v714, %v714
  %v740 = vmul.f32 %v715, %v715
  %v741 = vmul.f32 %v716, %v716
  %v742 = vmul.f32 %v717, %v717
  %v743 = vmul.f32 %v718, %v718
  %v744 = vmul.f32 %v719, %v719
  %v745 = vmul.f32 %v720, %v720
  %v746 = vmul.f32 %v721, %v721
  %v747 = vmul.f32 %v722, %v722
  %v748 = vmul.f32 %v723, %v723
  %v749 = vmul.f32 %v724, %v724
  %v750 = vmul.f32 %v725, %v725
  %v751 = vmul.f32 %v726, %v726
  %v752 = vmul.f32 %v727, %v727
  %v753 = vmul.f32 %v728, %v728
  %v754 = vmul.f32 %v729, %v729
  %v755 = vmul.f32 %v730, %v730
  %v756 = vmul.f32 %v731, %v731
  %v757 = vmul.f32 %v732, %v732
  %v758 = vmul.f32 %v733, %v733
  %v759 = vmul.f32 %v734, %v734
  %v760 = vmul.f32 %v735, %v735
  %v761 = vmul.f32 %v736, %v736
  %v762 = vmul.f32 %v737, %v737
  %v763 = vmul.f32 %v738, %v738
  %v764 = vmul.f32 %v739, 0.25
  %v765 = vmul.f32 %v740, 0.25
  %v766 = vmul.f32 %v741, 0.25
  %v767 = vmul.f32 %v742, 0.25
  %v768 = vmul.f32 %v743, 0.25
  %v769 = vmul.f32 %v744, 0.25
  %v770 = vmul.f32 %v745, 0.25
  %v771 = vmul.f32 %v746, 0.25
  %v772 = vmul.f32 %v747, 0.25
  %v773 = vmul.f32 %v748, 0.25
  %v774 = vmul.f32 %v749, 0.25
  %v775 = vmul.f32 %v750, 0.25
  %v776 = vmul.f32 %v751, 0.25
  %v777 = vmul.f32 %v752, 0.25
  %v778 = vmul.f32 %v753, 0.25
  %v779 = vmul.f32 %v754, 0.25
  %v780 = vmul.f32 %v755, 0.25
  %v781 = vmul.f32 %v756, 0.25
  %v782 = vmul.f32 %v757, 0.25
  %v783 = vmul.f32 %v758, 0.25
  %v784 = vmul.f32 %v759, 0.25
  %v785 = vmul.f32 %v760, 0.25
  %v786 = vmul.f32 %v761, 0.25
  %v787 = vmul.f32 %v762, 0.25
  %v788 = vmul.f32 %v763, 0.25
  %v789 = vmul.f32 %v764, %v639
  %v790 = vmul.f32 %v765, %v640
  %v791 = vmul.f32 %v766, %v641
  %v792 = vmul.f32 %v767, %v642
  %v793 = vmul.f32 %v768, %v643
  %v794 = vmul.f32 %v769, %v644
  %v795 = vmul.f32 %v770, %v645
  %v796 = vmul.f32 %v771, %v646
  %v797 = vmul.f32 %v772, %v647
  %v798 = vmul.f32 %v773, %v648
  %v799 = vmul.f32 %v774, %v649
  %v800 = vmul.f32 %v775, %v650
  %v801 = vmul.f32 %v776, %v651
  %v802 = vmul.f32 %v777, %v652
  %v803 = vmul.f32 %v778, %v653
  %v804 = vmul.f32 %v779, %v654
  %v805 = vmul.f32 %v780, %v655
  %v806 = vmul.f32 %v781, %v656
  %v807 = vmul.f32 %v782, %v657
  %v808 = vmul.f32 %v783, %v658
  %v809 = vmul.f32 %v784, %v659
  %v810 = vmul.f32 %v785, %v660
  %v811 = vmul.f32 %v786, %v661
  %v812 = vmul.f32 %v787, %v662
  %v813 = vmul.f32 %v788, %v663
  %vm814 = vcmask 7168
  %815 = vst.msk [vmem:[%s2] sm:$0xff] %vm814, %v789
  %816 = vst.msk [vmem:[%s2 + $0x8] sm:$0xff] %vm814, %v790
  %817 = vst.msk [vmem:[%s2 + $0x10] sm:$0xff] %vm814, %v791
  %818 = vst.msk [vmem:[%s2 + $0x18] sm:$0xff] %vm814, %v792
  %819 = vst.msk [vmem:[%s2 + $0x20] sm:$0xff] %vm814, %v793
  %820 = vst.msk [vmem:[%s2 + $0x28] sm:$0xff] %vm814, %v794
  %821 = vst.msk [vmem:[%s2 + $0x30] sm:$0xff] %vm814, %v795
  %822 = vst.msk [vmem:[%s2 + $0x38] sm:$0xff] %vm814, %v796
  %823 = vst.msk [vmem:[%s2 + $0x40] sm:$0xff] %vm814, %v797
  %824 = vst.msk [vmem:[%s2 + $0x48] sm:$0xff] %vm814, %v798
  %825 = vst.msk [vmem:[%s2 + $0x50] sm:$0xff] %vm814, %v799
  %826 = vst.msk [vmem:[%s2 + $0x58] sm:$0xff] %vm814, %v800
  %827 = vst.msk [vmem:[%s2 + $0x60] sm:$0xff] %vm814, %v801
  %828 = vst.msk [vmem:[%s2 + $0x68] sm:$0xff] %vm814, %v802
  %829 = vst.msk [vmem:[%s2 + $0x70] sm:$0xff] %vm814, %v803
  %830 = vst.msk [vmem:[%s2 + $0x78] sm:$0xff] %vm814, %v804
  %831 = vst.msk [vmem:[%s2 + $0x80] sm:$0xff] %vm814, %v805
  %832 = vst.msk [vmem:[%s2 + $0x88] sm:$0xff] %vm814, %v806
  %833 = vst.msk [vmem:[%s2 + $0x90] sm:$0xff] %vm814, %v807
  %834 = vst.msk [vmem:[%s2 + $0x98] sm:$0xff] %vm814, %v808
  %835 = vst.msk [vmem:[%s2 + $0xa0] sm:$0xff] %vm814, %v809
  %836 = vst.msk [vmem:[%s2 + $0xa8] sm:$0xff] %vm814, %v810
  %837 = vst.msk [vmem:[%s2 + $0xb0] sm:$0xff] %vm814, %v811
  %838 = vst.msk [vmem:[%s2 + $0xb8] sm:$0xff] %vm814, %v812
  %839 = vst.msk [vmem:[%s2 + $0xc0] sm:$0xff] %vm814, %v813
  // Predicated region
  $region10: #{tpu_custom_call.1} parent=0 // pred_check
    _
  $region11: #{tpu_custom_call.1} parent=0 // pred_check_branch
    %841 = sbr.rel (0) target = $region13
  $region12: #{tpu_custom_call.1} parent=0 // pred_region
    _
  $region13: #{tpu_custom_call.1} parent=0 // pred_fallthru
    _
  // Predicated region
  $region14: #{tpu_custom_call.1} parent=0 // pred_check
    _
  $region15: #{tpu_custom_call.1} parent=0 // pred_check_branch
    %843 = sbr.rel (0) target = $region17
  $region16: #{tpu_custom_call.1} parent=0 // pred_region
    _
  $region17: #{tpu_custom_call.1} parent=0 // pred_fallthru
    _

</llo_original>
